<compile_context>
chip_gen: v5e
topology: v5e:2x2
jax: 0.10.0
libtpu: 0.0.40
codegen_flags: <defaults>
</compile_context>

<pallas_src>
import jax
import jax.numpy as jnp
from jax.experimental import pallas as pl
from jax.experimental.pallas import tpu as pltpu


def mlp_g_kernel(att_ref, noise_ref, lat_ref,
                 w1a_ref, w1n_ref, w1l_ref, b1_ref,
                 w2_ref, b2_ref, o_ref):
    bf16 = jnp.bfloat16
    # fc1: [att | noise | latent] @ W1 as three partial dots (fused concat),
    # bf16 MXU operands, f32 accumulation.
    h = jnp.dot(att_ref[...].astype(bf16), w1a_ref[...],
                preferred_element_type=jnp.float32)
    h = h + jnp.dot(noise_ref[...].astype(bf16), w1n_ref[...],
                    preferred_element_type=jnp.float32)
    h = h + jnp.dot(lat_ref[...].astype(bf16), w1l_ref[...],
                    preferred_element_type=jnp.float32)
    h = h + b1_ref[...]                      # (1, ngh) broadcasts over batch
    h = jnp.where(h > 0, h, 0.2 * h)         # LeakyReLU(0.2), f32 VPU path
    # fc2 + ReLU
    h2 = jnp.dot(h.astype(bf16), w2_ref[...],
                 preferred_element_type=jnp.float32)
    h2 = h2 + b2_ref[...]
    o_ref[...] = jnp.maximum(h2, 0.0).astype(o_ref.dtype)


def _round_up(x, m):
    return ((x + m - 1) // m) * m


def mlp_g_forward(noise, att, latent_x, params, mean=None, var=None, *, tm=256):
    """noise: [B, nz], att: [B, attSize], latent_x: [B, latent_dim].

    `mean` / `var` are accepted (PyTorch forward signature) but unused.
    params = (w1_att, w1_noise, w1_lat, b1, w2, b2): weights are (in, out)
    bf16 slabs (W1 pre-split to match the torch.cat order), biases (1, out) f32.
    """
    del mean, var
    w1a, w1n, w1l, b1, w2, b2 = params
    B = att.shape[0]
    att_size = att.shape[1]
    nz = noise.shape[1]
    latent_dim = latent_x.shape[1]
    H = w2.shape[0]
    Dout = w2.shape[1]

    # Batch tile: whole (8-aligned) batch in one step when small, else `tm`.
    tm_eff = min(tm, _round_up(B, 8))
    B_pad = _round_up(B, tm_eff)
    if B_pad != B:
        pad = ((0, B_pad - B), (0, 0))
        att = jnp.pad(att, pad)
        noise = jnp.pad(noise, pad)
        latent_x = jnp.pad(latent_x, pad)

    # Weights/biases never change across the grid -> single-buffered residents.
    resident = dict(pipeline_mode=pl.Buffered(1))

    out = pl.pallas_call(
        mlp_g_kernel,
        out_shape=jax.ShapeDtypeStruct((B_pad, Dout), jnp.float32),
        grid_spec=pltpu.PrefetchScalarGridSpec(
            num_scalar_prefetch=0,
            grid=(B_pad // tm_eff,),
            in_specs=[
                pl.BlockSpec((tm_eff, att_size), lambda i: (i, 0)),   # att tile
                pl.BlockSpec((tm_eff, nz), lambda i: (i, 0)),         # noise tile
                pl.BlockSpec((tm_eff, latent_dim), lambda i: (i, 0)), # latent tile
                pl.BlockSpec((att_size, H), lambda i: (0, 0), **resident),  # W1[att]
                pl.BlockSpec((nz, H), lambda i: (0, 0), **resident),        # W1[noise]
                pl.BlockSpec((latent_dim, H), lambda i: (0, 0), **resident),# W1[latent]
                pl.BlockSpec((1, H), lambda i: (0, 0), **resident),         # b1
                pl.BlockSpec((H, Dout), lambda i: (0, 0), **resident),      # W2
                pl.BlockSpec((1, Dout), lambda i: (0, 0), **resident),      # b2
            ],
            out_specs=pl.BlockSpec((tm_eff, Dout), lambda i: (i, 0)),
        ),
        compiler_params=pltpu.CompilerParams(
            dimension_semantics=("parallel",),
            vmem_limit_bytes=48 * 1024 * 1024,
        ),
    )(att, noise, latent_x, w1a, w1n, w1l, b1, w2, b2)

    return out[:B] if B_pad != B else out


def init_mlp_g_params(key, nz, att_size, latent_dim, ngh, res_size):
    """weights_init: Linear.weight ~ N(0, 0.02), Linear.bias = 0.

    Weights are stored transposed (in, out) and in bfloat16; W1 is split
    row-wise into (att | noise | latent) slabs matching the torch.cat order.
    """
    k1, k2, k3 = jax.random.split(key, 3)
    din = att_size + nz + latent_dim
    w1t = 0.02 * jax.random.normal(k1, (din, ngh), jnp.float32)
    w1a = w1t[:att_size].astype(jnp.bfloat16)
    w1n = w1t[att_size:att_size + nz].astype(jnp.bfloat16)
    w1l = w1t[att_size + nz:].astype(jnp.bfloat16)
    b1 = jnp.zeros((1, ngh), jnp.float32)
    w2t = (0.02 * jax.random.normal(k2, (ngh, res_size), jnp.float32)
           ).astype(jnp.bfloat16)
    b2 = jnp.zeros((1, res_size), jnp.float32)
    # fc3 exists in __init__ but is unused by forward; init only for fidelity.
    _w3t = 0.02 * jax.random.normal(k3, (res_size, res_size), jnp.float32)
    _b3 = jnp.zeros((1, res_size), jnp.float32)
    return (w1a, w1n, w1l, b1, w2t, b2)


if __name__ == "__main__":
    # Small, 128-aligned synthetic config.
    nz, att_size, latent_dim = 32, 32, 64   # concat dim = 128
    ngh, res_size = 128, 128
    B = 8

    key = jax.random.PRNGKey(0)
    kp, kn, ka, kl, km, kv = jax.random.split(key, 6)

    params = init_mlp_g_params(kp, nz, att_size, latent_dim, ngh, res_size)

    noise = jax.random.normal(kn, (B, nz), jnp.float32)
    att = jax.random.normal(ka, (B, att_size), jnp.float32)
    latent_x = jax.random.normal(kl, (B, latent_dim), jnp.float32)
    mean = jax.random.normal(km, (B, res_size), jnp.float32)  # unused by forward
    var = jax.random.normal(kv, (B, res_size), jnp.float32)   # unused by forward

    out = mlp_g_forward(noise, att, latent_x, params, mean, var)
    out = jax.block_until_ready(out)

    # Pure-JAX reference on the same (bf16-quantized) weights, f32 math.
    w1a, w1n, w1l, b1, w2, b2 = params
    w1t = jnp.concatenate([w1a.astype(jnp.float32),
                           w1n.astype(jnp.float32),
                           w1l.astype(jnp.float32)], axis=0)
    x = jnp.concatenate([att, noise, latent_x], axis=1)
    h = x @ w1t + b1
    h = jnp.where(h > 0, h, 0.2 * h)
    ref = jnp.maximum(h @ w2.astype(jnp.float32) + b2, 0.0)

    assert out.shape == (B, res_size)
    # bf16 matmul operands (f32 accumulation) -> loosened tolerance.
    assert jnp.allclose(out, ref, atol=5e-3, rtol=2e-2), \
        float(jnp.max(jnp.abs(out - ref)))

    print("KERNEL_OK")
</pallas_src>

<mosaic_0001>
module attributes {stable_mosaic.version = 11 : i64} {
  func.func @mlp_g_kernel(%arg0: i32, %arg1: memref<8x32xf32, #tpu.memory_space<vmem>>, %arg2: memref<8x32xf32, #tpu.memory_space<vmem>>, %arg3: memref<8x64xf32, #tpu.memory_space<vmem>>, %arg4: memref<32x128xbf16, #tpu.memory_space<vmem>>, %arg5: memref<32x128xbf16, #tpu.memory_space<vmem>>, %arg6: memref<64x128xbf16, #tpu.memory_space<vmem>>, %arg7: memref<1x128xf32, #tpu.memory_space<vmem>>, %arg8: memref<128x128xbf16, #tpu.memory_space<vmem>>, %arg9: memref<1x128xf32, #tpu.memory_space<vmem>>, %arg10: memref<8x128xf32, #tpu.memory_space<vmem>>) attributes {dimension_semantics = [#tpu.dimension_semantics<parallel>], iteration_bounds = array<i64: 1>, scalar_prefetch = 0 : i64, scratch_operands = 0 : i64, tpu.core_type = #tpu.core_type<tc>, window_params = [{transform_indices = @transform_0, window_bounds = array<i64: 8, 32>}, {transform_indices = @transform_1, window_bounds = array<i64: 8, 32>}, {transform_indices = @transform_2, window_bounds = array<i64: 8, 64>}, {pipeline_mode = #tpu.pipeline_mode<synchronous>, transform_indices = @transform_3, window_bounds = array<i64: 32, 128>}, {pipeline_mode = #tpu.pipeline_mode<synchronous>, transform_indices = @transform_4, window_bounds = array<i64: 32, 128>}, {pipeline_mode = #tpu.pipeline_mode<synchronous>, transform_indices = @transform_5, window_bounds = array<i64: 64, 128>}, {pipeline_mode = #tpu.pipeline_mode<synchronous>, transform_indices = @transform_6, window_bounds = array<i64: 1, 128>}, {pipeline_mode = #tpu.pipeline_mode<synchronous>, transform_indices = @transform_7, window_bounds = array<i64: 128, 128>}, {pipeline_mode = #tpu.pipeline_mode<synchronous>, transform_indices = @transform_8, window_bounds = array<i64: 1, 128>}, {transform_indices = @transform_9, window_bounds = array<i64: 8, 128>}]} {
    %c0 = arith.constant 0 : index
    %c0_0 = arith.constant 0 : index
    %0 = vector.load %arg1[%c0, %c0_0] : memref<8x32xf32, #tpu.memory_space<vmem>>, vector<8x32xf32>
    %1 = arith.truncf %0 : vector<8x32xf32> to vector<8x32xbf16>
    %c0_1 = arith.constant 0 : index
    %c0_2 = arith.constant 0 : index
    %2 = vector.load %arg4[%c0_1, %c0_2] : memref<32x128xbf16, #tpu.memory_space<vmem>>, vector<32x128xbf16>
    %cst = arith.constant dense<0.000000e+00> : vector<8x128xf32>
    %3 = tpu.matmul %1, %2, %cst {dimension_numbers = #tpu.dot_dimension_numbers<[1], [0], [0], [1], [0, 0, 1, 1], [], []>} : vector<8x32xbf16>, vector<32x128xbf16>, vector<8x128xf32> -> vector<8x128xf32>
    %c0_3 = arith.constant 0 : index
    %c0_4 = arith.constant 0 : index
    %4 = vector.load %arg2[%c0_3, %c0_4] : memref<8x32xf32, #tpu.memory_space<vmem>>, vector<8x32xf32>
    %5 = arith.truncf %4 : vector<8x32xf32> to vector<8x32xbf16>
    %c0_5 = arith.constant 0 : index
    %c0_6 = arith.constant 0 : index
    %6 = vector.load %arg5[%c0_5, %c0_6] : memref<32x128xbf16, #tpu.memory_space<vmem>>, vector<32x128xbf16>
    %cst_7 = arith.constant dense<0.000000e+00> : vector<8x128xf32>
    %7 = tpu.matmul %5, %6, %cst_7 {dimension_numbers = #tpu.dot_dimension_numbers<[1], [0], [0], [1], [0, 0, 1, 1], [], []>} : vector<8x32xbf16>, vector<32x128xbf16>, vector<8x128xf32> -> vector<8x128xf32>
    %8 = arith.addf %3, %7 : vector<8x128xf32>
    %c0_8 = arith.constant 0 : index
    %c0_9 = arith.constant 0 : index
    %9 = vector.load %arg3[%c0_8, %c0_9] : memref<8x64xf32, #tpu.memory_space<vmem>>, vector<8x64xf32>
    %10 = arith.truncf %9 : vector<8x64xf32> to vector<8x64xbf16>
    %c0_10 = arith.constant 0 : index
    %c0_11 = arith.constant 0 : index
    %11 = vector.load %arg6[%c0_10, %c0_11] : memref<64x128xbf16, #tpu.memory_space<vmem>>, vector<64x128xbf16>
    %cst_12 = arith.constant dense<0.000000e+00> : vector<8x128xf32>
    %12 = tpu.matmul %10, %11, %cst_12 {dimension_numbers = #tpu.dot_dimension_numbers<[1], [0], [0], [1], [0, 0, 1, 1], [], []>} : vector<8x64xbf16>, vector<64x128xbf16>, vector<8x128xf32> -> vector<8x128xf32>
    %13 = arith.addf %8, %12 : vector<8x128xf32>
    %c0_13 = arith.constant 0 : index
    %c0_14 = arith.constant 0 : index
    %14 = vector.load %arg7[%c0_13, %c0_14] : memref<1x128xf32, #tpu.memory_space<vmem>>, vector<1x128xf32>
    %15 = vector.broadcast %14 : vector<1x128xf32> to vector<8x128xf32>
    %16 = arith.addf %13, %15 : vector<8x128xf32>
    %cst_15 = arith.constant 0.000000e+00 : f32
    %17 = vector.broadcast %cst_15 : f32 to vector<8x128xf32>
    %18 = arith.cmpf ogt, %16, %17 : vector<8x128xf32>
    %cst_16 = arith.constant 2.000000e-01 : f32
    %19 = vector.broadcast %cst_16 : f32 to vector<8x128xf32>
    %20 = arith.mulf %19, %16 : vector<8x128xf32>
    %21 = arith.select %18, %16, %20 : vector<8x128xi1>, vector<8x128xf32>
    %22 = arith.truncf %21 : vector<8x128xf32> to vector<8x128xbf16>
    %c0_17 = arith.constant 0 : index
    %c0_18 = arith.constant 0 : index
    %23 = vector.load %arg8[%c0_17, %c0_18] : memref<128x128xbf16, #tpu.memory_space<vmem>>, vector<128x128xbf16>
    %cst_19 = arith.constant dense<0.000000e+00> : vector<8x128xf32>
    %24 = tpu.matmul %22, %23, %cst_19 {dimension_numbers = #tpu.dot_dimension_numbers<[1], [0], [0], [1], [0, 0, 1, 1], [], []>} : vector<8x128xbf16>, vector<128x128xbf16>, vector<8x128xf32> -> vector<8x128xf32>
    %c0_20 = arith.constant 0 : index
    %c0_21 = arith.constant 0 : index
    %25 = vector.load %arg9[%c0_20, %c0_21] : memref<1x128xf32, #tpu.memory_space<vmem>>, vector<1x128xf32>
    %26 = vector.broadcast %25 : vector<1x128xf32> to vector<8x128xf32>
    %27 = arith.addf %24, %26 : vector<8x128xf32>
    %cst_22 = arith.constant 0.000000e+00 : f32
    %28 = vector.broadcast %cst_22 : f32 to vector<8x128xf32>
    %29 = arith.maximumf %27, %28 : vector<8x128xf32>
    %c0_23 = arith.constant 0 : index
    %c0_24 = arith.constant 0 : index
    %30 = vector.load %arg10[%c0_23, %c0_24] : memref<8x128xf32, #tpu.memory_space<vmem>>, vector<8x128xf32>
    tpu.vector_store %arg10[%c0_23, %c0_24], %29 {strides = array<i32>} : memref<8x128xf32, #tpu.memory_space<vmem>>, vector<8x128xf32>,
    return
  }
  func.func @transform_0(%arg0: i32) -> (i32, i32) {
    %c0_i32 = arith.constant 0 : i32
    %c0_i32_0 = arith.constant 0 : i32
    return %arg0, %c0_i32 : i32, i32
  }
  func.func @transform_1(%arg0: i32) -> (i32, i32) {
    %c0_i32 = arith.constant 0 : i32
    %c0_i32_0 = arith.constant 0 : i32
    return %arg0, %c0_i32 : i32, i32
  }
  func.func @transform_2(%arg0: i32) -> (i32, i32) {
    %c0_i32 = arith.constant 0 : i32
    %c0_i32_0 = arith.constant 0 : i32
    return %arg0, %c0_i32 : i32, i32
  }
  func.func @transform_3(%arg0: i32) -> (i32, i32) {
    %c0_i32 = arith.constant 0 : i32
    %c0_i32_0 = arith.constant 0 : i32
    %c0_i32_1 = arith.constant 0 : i32
    return %c0_i32, %c0_i32_0 : i32, i32
  }
  func.func @transform_4(%arg0: i32) -> (i32, i32) {
    %c0_i32 = arith.constant 0 : i32
    %c0_i32_0 = arith.constant 0 : i32
    %c0_i32_1 = arith.constant 0 : i32
    return %c0_i32, %c0_i32_0 : i32, i32
  }
  func.func @transform_5(%arg0: i32) -> (i32, i32) {
    %c0_i32 = arith.constant 0 : i32
    %c0_i32_0 = arith.constant 0 : i32
    %c0_i32_1 = arith.constant 0 : i32
    return %c0_i32, %c0_i32_0 : i32, i32
  }
  func.func @transform_6(%arg0: i32) -> (i32, i32) {
    %c0_i32 = arith.constant 0 : i32
    %c0_i32_0 = arith.constant 0 : i32
    %c0_i32_1 = arith.constant 0 : i32
    return %c0_i32, %c0_i32_0 : i32, i32
  }
  func.func @transform_7(%arg0: i32) -> (i32, i32) {
    %c0_i32 = arith.constant 0 : i32
    %c0_i32_0 = arith.constant 0 : i32
    %c0_i32_1 = arith.constant 0 : i32
    return %c0_i32, %c0_i32_0 : i32, i32
  }
  func.func @transform_8(%arg0: i32) -> (i32, i32) {
    %c0_i32 = arith.constant 0 : i32
    %c0_i32_0 = arith.constant 0 : i32
    %c0_i32_1 = arith.constant 0 : i32
    return %c0_i32, %c0_i32_0 : i32, i32
  }
  func.func @transform_9(%arg0: i32) -> (i32, i32) {
    %c0_i32 = arith.constant 0 : i32
    %c0_i32_0 = arith.constant 0 : i32
    return %arg0, %c0_i32 : i32, i32
  }
}

</mosaic_0001>

<llo_original>
// kernel: tpu_custom_call.1
$region0: #{tpu_custom_call.1}
  #allocation0 [shape = 'u32[]', space=smem, size = 0x4, offset = 0x4, fixed_abs, tag = 'smem constant byte address 0x4 - core index']
  #allocation1 [shape = 'u32[72,128]{1,0:T(1,128)}', space=vmem, size = 0x9000, scoped, tag = 'internal scratch']
  %s0 = inlined_call_operand.hbm [shape: f32[8,32], index: 0, kind: input, shape index: {}]
  %s1 = inlined_call_operand.hbm [shape: f32[8,32], index: 1, kind: input, shape index: {}]
  %s2 = inlined_call_operand.hbm [shape: f32[8,64], index: 2, kind: input, shape index: {}]
  %s3 = inlined_call_operand.hbm [shape: bf16[32,128], index: 3, kind: input, shape index: {}]
  %s4 = inlined_call_operand.hbm [shape: bf16[32,128], index: 4, kind: input, shape index: {}]
  %s5 = inlined_call_operand.hbm [shape: bf16[64,128], index: 5, kind: input, shape index: {}]
  %s6 = inlined_call_operand.vmem [shape: f32[1,128], index: 6, kind: input, shape index: {}]
  %s7 = inlined_call_operand.hbm [shape: bf16[128,128], index: 7, kind: input, shape index: {}]
  %s8 = inlined_call_operand.vmem [shape: f32[1,128], index: 8, kind: input, shape index: {}]
  %s9 = inlined_call_operand.hbm [shape: f32[8,128], index: 9, kind: output, shape index: {}]
  %s10 = sld [smem:[#allocation0]]
  $region74: #{tpu_custom_call.1} parent=0
    _
  %s12 = ssub.s32 1, %s10
  %s13 = scalar_select 0, %s12, %s10
  $region1: #{tpu_custom_call.1} parent=0
    #allocation2 [shape = 'u8[4096]{0}', space=vmem, size = 0x1000, scoped, tag = 'input window, operand 0, single buffered']
    #allocation3 [shape = 's32[1]{0}', space=sflag, size = 0x4, scoped, tag = 'scoped memory for tpu_custom_call.1']
    #allocation4 [shape = 's32[1]{0}', space=sflag, size = 0x4, scoped, tag = 'scoped memory for tpu_custom_call.1']
    #allocation5 [shape = 'u8[4096]{0}', space=vmem, size = 0x1000, scoped, tag = 'input window, operand 1, single buffered']
    #allocation6 [shape = 's32[1]{0}', space=sflag, size = 0x4, scoped, tag = 'scoped memory for tpu_custom_call.1']
    #allocation7 [shape = 'u8[4096]{0}', space=vmem, size = 0x1000, scoped, tag = 'input window, operand 2, single buffered']
    #allocation8 [shape = 'u8[8192]{0}', space=vmem, size = 0x2000, scoped, tag = 'input window, operand 3, single buffered']
    #allocation9 [shape = 's32[1]{0}', space=sflag, size = 0x4, scoped, tag = 'scoped memory for tpu_custom_call.1']
    #allocation10 [shape = 'u8[8192]{0}', space=vmem, size = 0x2000, scoped, tag = 'input window, operand 4, single buffered']
    #allocation11 [shape = 'u8[16384]{0}', space=vmem, size = 0x4000, scoped, tag = 'input window, operand 5, single buffered']
    #allocation12 [shape = 's32[1]{0}', space=sflag, size = 0x4, scoped, tag = 'scoped memory for tpu_custom_call.1']
    #allocation13 [shape = 'u8[32768]{0}', space=vmem, size = 0x8000, scoped, tag = 'input window, operand 7, single buffered']
    #allocation14 [shape = 'u8[4096]{0}', space=vmem, size = 0x1000, scoped, tag = 'output window, operand 0, single buffered']
    %14 = vsyncpa [#allocation3], 0
    %15 = vsyncpa [#allocation6], 0
    %16 = vsyncpa [#allocation9], 0
    %17 = vsyncpa [#allocation12], 0
    %18 = vsyncpa [#allocation4], 0
    // Predicated region
    $region2: #{tpu_custom_call.1} parent=1 // pred_check
      _
    $region3: #{tpu_custom_call.1} parent=1 // pred_check_branch
      %20 = sbr.rel (0) target = $region5
    $region4: #{tpu_custom_call.1} parent=1 // pred_region
      %22 = vsyncadd [#allocation3], 0
      %s24 = sshll.u32 %s0, 4
      %s25 = int_to_ptr.hbm [resolvable:$true] %s24
      %s26 = sshll.u32 [#allocation2], 4
      %s27 = int_to_ptr.vmem [resolvable:$true] %s26
      %29 = dma.hbm_to_vmem [thread:$0]  %s25, 128, %s27, [#allocation3]
    $region5: #{tpu_custom_call.1} parent=1 // pred_fallthru
      _
    // Predicated region
    $region6: #{tpu_custom_call.1} parent=1 // pred_check
      _
    $region7: #{tpu_custom_call.1} parent=1 // pred_check_branch
      %31 = sbr.rel (0) target = $region9
    $region8: #{tpu_custom_call.1} parent=1 // pred_region
      %33 = vsyncadd [#allocation6], 0
      %s35 = sshll.u32 %s1, 4
      %s36 = int_to_ptr.hbm [resolvable:$true] %s35
      %s37 = sshll.u32 [#allocation5], 4
      %s38 = int_to_ptr.vmem [resolvable:$true] %s37
      %40 = dma.hbm_to_vmem [thread:$0]  %s36, 128, %s38, [#allocation6]
    $region9: #{tpu_custom_call.1} parent=1 // pred_fallthru
      _
    // Predicated region
    $region10: #{tpu_custom_call.1} parent=1 // pred_check
      _
    $region11: #{tpu_custom_call.1} parent=1 // pred_check_branch
      %42 = sbr.rel (0) target = $region13
    $region12: #{tpu_custom_call.1} parent=1 // pred_region
      %44 = vsyncadd [#allocation6], 0
      %s46 = sshll.u32 %s2, 4
      %s47 = int_to_ptr.hbm [resolvable:$true] %s46
      %s48 = sshll.u32 [#allocation7], 4
      %s49 = int_to_ptr.vmem [resolvable:$true] %s48
      %51 = dma.hbm_to_vmem [thread:$0]  %s47, 128, %s49, [#allocation6]
    $region13: #{tpu_custom_call.1} parent=1 // pred_fallthru
      _
    // Predicated region
    $region14: #{tpu_custom_call.1} parent=1 // pred_check
      _
    $region15: #{tpu_custom_call.1} parent=1 // pred_check_branch
      %53 = sbr.rel (0) target = $region17
    $region16: #{tpu_custom_call.1} parent=1 // pred_region
      %55 = vsyncadd [#allocation9], 0
      %s56 = sshll.u32 %s3, 4
      %s57 = int_to_ptr.hbm [resolvable:$true] %s56
      %s58 = sshll.u32 [#allocation8], 4
      %s59 = int_to_ptr.vmem [resolvable:$true] %s58
      %64 = dma.hbm_to_vmem [thread:$0]  %s57, 256, %s59, [#allocation9], 64, 64, 4
    $region17: #{tpu_custom_call.1} parent=1 // pred_fallthru
      _
    // Predicated region
    $region18: #{tpu_custom_call.1} parent=1 // pred_check
      _
    $region19: #{tpu_custom_call.1} parent=1 // pred_check_branch
      %66 = sbr.rel (0) target = $region21
    $region20: #{tpu_custom_call.1} parent=1 // pred_region
      %68 = vsyncadd [#allocation9], 0
      %s69 = sshll.u32 %s4, 4
      %s70 = int_to_ptr.hbm [resolvable:$true] %s69
      %s71 = sshll.u32 [#allocation10], 4
      %s72 = int_to_ptr.vmem [resolvable:$true] %s71
      %77 = dma.hbm_to_vmem [thread:$0]  %s70, 256, %s72, [#allocation9], 64, 64, 4
    $region21: #{tpu_custom_call.1} parent=1 // pred_fallthru
      _
    // Predicated region
    $region22: #{tpu_custom_call.1} parent=1 // pred_check
      _
    $region23: #{tpu_custom_call.1} parent=1 // pred_check_branch
      %79 = sbr.rel (0) target = $region25
    $region24: #{tpu_custom_call.1} parent=1 // pred_region
      %81 = vsyncadd [#allocation12], 0
      %s82 = sshll.u32 %s5, 4
      %s83 = int_to_ptr.hbm [resolvable:$true] %s82
      %s84 = sshll.u32 [#allocation11], 4
      %s85 = int_to_ptr.vmem [resolvable:$true] %s84
      %90 = dma.hbm_to_vmem [thread:$0]  %s83, 512, %s85, [#allocation12], 64, 64, 4
    $region25: #{tpu_custom_call.1} parent=1 // pred_fallthru
      _
    // Predicated region
    $region26: #{tpu_custom_call.1} parent=1 // pred_check
      _
    $region27: #{tpu_custom_call.1} parent=1 // pred_check_branch
      %92 = sbr.rel (0) target = $region29
    $region28: #{tpu_custom_call.1} parent=1 // pred_region
      _
    $region29: #{tpu_custom_call.1} parent=1 // pred_fallthru
      _
    // Predicated region
    $region30: #{tpu_custom_call.1} parent=1 // pred_check
      _
    $region31: #{tpu_custom_call.1} parent=1 // pred_check_branch
      %94 = sbr.rel (0) target = $region33
    $region32: #{tpu_custom_call.1} parent=1 // pred_region
      %96 = vsyncadd [#allocation12], 0
      %s97 = sshll.u32 %s7, 4
      %s98 = int_to_ptr.hbm [resolvable:$true] %s97
      %s99 = sshll.u32 [#allocation13], 4
      %s100 = int_to_ptr.vmem [resolvable:$true] %s99
      %105 = dma.hbm_to_vmem [thread:$0]  %s98, 1024, %s100, [#allocation12], 64, 64, 4
    $region33: #{tpu_custom_call.1} parent=1 // pred_fallthru
      _
    // Predicated region
    $region34: #{tpu_custom_call.1} parent=1 // pred_check
      _
    $region35: #{tpu_custom_call.1} parent=1 // pred_check_branch
      %107 = sbr.rel (0) target = $region37
    $region36: #{tpu_custom_call.1} parent=1 // pred_region
      _
    $region37: #{tpu_custom_call.1} parent=1 // pred_fallthru
      _
    // Predicated region
    $region38: #{tpu_custom_call.1} parent=1 // pred_check
      _
    $region39: #{tpu_custom_call.1} parent=1 // pred_check_branch
      %109 = sbr.rel (0) target = $region41
    $region40: #{tpu_custom_call.1} parent=1 // pred_region
      %111 = dma.done [#allocation3], 128
    $region41: #{tpu_custom_call.1} parent=1 // pred_fallthru
      _
    // Predicated region
    $region42: #{tpu_custom_call.1} parent=1 // pred_check
      _
    $region43: #{tpu_custom_call.1} parent=1 // pred_check_branch
      %113 = sbr.rel (0) target = $region45
    $region44: #{tpu_custom_call.1} parent=1 // pred_region
      %115 = dma.done [#allocation6], 128
    $region45: #{tpu_custom_call.1} parent=1 // pred_fallthru
      _
    // Predicated region
    $region46: #{tpu_custom_call.1} parent=1 // pred_check
      _
    $region47: #{tpu_custom_call.1} parent=1 // pred_check_branch
      %117 = sbr.rel (0) target = $region49
    $region48: #{tpu_custom_call.1} parent=1 // pred_region
      %119 = dma.done [#allocation6], 128
    $region49: #{tpu_custom_call.1} parent=1 // pred_fallthru
      _
    // Predicated region
    $region50: #{tpu_custom_call.1} parent=1 // pred_check
      _
    $region51: #{tpu_custom_call.1} parent=1 // pred_check_branch
      %121 = sbr.rel (0) target = $region53
    $region52: #{tpu_custom_call.1} parent=1 // pred_region
      %123 = dma.done [#allocation9], 256
    $region53: #{tpu_custom_call.1} parent=1 // pred_fallthru
      _
    // Predicated region
    $region54: #{tpu_custom_call.1} parent=1 // pred_check
      _
    $region55: #{tpu_custom_call.1} parent=1 // pred_check_branch
      %125 = sbr.rel (0) target = $region57
    $region56: #{tpu_custom_call.1} parent=1 // pred_region
      %127 = dma.done [#allocation9], 256
    $region57: #{tpu_custom_call.1} parent=1 // pred_fallthru
      _
    // Predicated region
    $region58: #{tpu_custom_call.1} parent=1 // pred_check
      _
    $region59: #{tpu_custom_call.1} parent=1 // pred_check_branch
      %129 = sbr.rel (0) target = $region61
    $region60: #{tpu_custom_call.1} parent=1 // pred_region
      %131 = dma.done [#allocation12], 512
    $region61: #{tpu_custom_call.1} parent=1 // pred_fallthru
      _
    // Predicated region
    $region62: #{tpu_custom_call.1} parent=1 // pred_check
      _
    $region63: #{tpu_custom_call.1} parent=1 // pred_check_branch
      %133 = sbr.rel (0) target = $region65
    $region64: #{tpu_custom_call.1} parent=1 // pred_region
      %135 = dma.done [#allocation12], 1024
    $region65: #{tpu_custom_call.1} parent=1 // pred_fallthru
      _
    %v137 = vld [vmem:[#allocation2] sm:$0xff]
    %v138 = vpack.c.bf16 %v137, %v137
    %v139 = vld [vmem:[#allocation8] sm:$0xf]
    %v140 = vld [vmem:[#allocation8 + $0x4] sm:$0xf]
    %v141 = vld [vmem:[#allocation8 + $0x8] sm:$0xf]
    %v142 = vld [vmem:[#allocation8 + $0xc] sm:$0xf]
    %v143 = vld [vmem:[#allocation5] sm:$0xff]
    %v144 = vpack.c.bf16 %v143, %v143
    %v145 = vld [vmem:[#allocation10] sm:$0xf]
    %v146 = vld [vmem:[#allocation10 + $0x4] sm:$0xf]
    %v147 = vld [vmem:[#allocation10 + $0x8] sm:$0xf]
    %v148 = vld [vmem:[#allocation10 + $0xc] sm:$0xf]
    %v153 = vunpack.c.l.b16 %v145
    %v154 = vunpack.c.l.b16 %v146
    %v155 = vunpack.c.l.b16 %v147
    %v156 = vunpack.c.l.b16 %v148
    %v157 = vpack.c.b16 %v154, %v153
    %v158 = vpack.c.b16 %v156, %v155
    %vm161 = vcmask 261120
    %v163 = vsel %vm161, %v144, 0
    %165 = vmatpush.bf16.msra.mxu0 0
    %166 = vmatpush.bf16.msra.mxu0 0
    %167 = vmatpush.bf16.msra.mxu0 0
    %168 = vmatpush.bf16.msra.mxu0 0
    %169 = vmatpush.bf16.msra.mxu0 0
    %170 = vmatpush.bf16.msra.mxu0 0
    %171 = vmatpush.bf16.msra.mxu0 %v158
    %172 = vmatpush.bf16.msra.mxu0 %v157
    %173 = vmatmul.bf16.gmra.mxu0 %v163
    %v174 = vpop.f32.mrf.mxu0
    %v175 = vadd.f32 0.0, %v174
    %v176 = vpop.f32.mrf.mxu0
    %177 = vdwg.mxu0
    %v182 = vunpack.c.l.b16 %v139
    %v183 = vunpack.c.l.b16 %v140
    %v184 = vunpack.c.l.b16 %v141
    %v185 = vunpack.c.l.b16 %v142
    %v186 = vpack.c.b16 %v183, %v182
    %v187 = vpack.c.b16 %v185, %v184
    %v191 = vsel %vm161, %v138, 0
    %193 = vmatpush.bf16.msra.mxu0 0
    %194 = vmatpush.bf16.msra.mxu0 0
    %195 = vmatpush.bf16.msra.mxu0 0
    %196 = vmatpush.bf16.msra.mxu0 0
    %197 = vmatpush.bf16.msra.mxu0 0
    %198 = vmatpush.bf16.msra.mxu0 0
    %199 = vmatpush.bf16.msra.mxu0 %v187
    %200 = vmatpush.bf16.msra.mxu0 %v186
    %201 = vmatmul.bf16.gmra.mxu0 %v191
    %v202 = vpop.f32.mrf.mxu0
    %v203 = vadd.f32 %v175, %v202
    %v204 = vpop.f32.mrf.mxu0
    %205 = vdwg.mxu0
    %v206 = vld [vmem:[#allocation7] sm:$0xff]
    %v207 = vpack.c.bf16 %v206, %v206
    %v208 = vld [vmem:[#allocation11] sm:$0xf]
    %v209 = vld [vmem:[#allocation11 + $0x4] sm:$0xf]
    %v210 = vld [vmem:[#allocation11 + $0x8] sm:$0xf]
    %v211 = vld [vmem:[#allocation11 + $0xc] sm:$0xf]
    %v212 = vld [vmem:[#allocation11 + $0x10] sm:$0xf]
    %v213 = vld [vmem:[#allocation11 + $0x14] sm:$0xf]
    %v214 = vld [vmem:[#allocation11 + $0x18] sm:$0xf]
    %v215 = vld [vmem:[#allocation11 + $0x1c] sm:$0xf]
    %v224 = vunpack.c.l.b16 %v208
    %v225 = vunpack.c.l.b16 %v209
    %v226 = vunpack.c.l.b16 %v210
    %v227 = vunpack.c.l.b16 %v211
    %v228 = vunpack.c.l.b16 %v212
    %v229 = vunpack.c.l.b16 %v213
    %v230 = vunpack.c.l.b16 %v214
    %v231 = vunpack.c.l.b16 %v215
    %v232 = vpack.c.b16 %v225, %v224
    %v233 = vpack.c.b16 %v227, %v226
    %v234 = vpack.c.b16 %v229, %v228
    %v235 = vpack.c.b16 %v231, %v230
    %vm240 = vcmask 523264
    %v242 = vsel %vm240, %v207, 0
    %244 = vmatpush.bf16.msra.mxu0 0
    %245 = vmatpush.bf16.msra.mxu0 0
    %246 = vmatpush.bf16.msra.mxu0 0
    %247 = vmatpush.bf16.msra.mxu0 0
    %248 = vmatpush.bf16.msra.mxu0 %v235
    %249 = vmatpush.bf16.msra.mxu0 %v234
    %250 = vmatpush.bf16.msra.mxu0 %v233
    %251 = vmatpush.bf16.msra.mxu0 %v232
    %252 = vmatmul.bf16.gmra.mxu0 %v242
    %v253 = vpop.f32.mrf.mxu0
    %v254 = vadd.f32 0.0, %v253
    %v255 = vpop.f32.mrf.mxu0
    %256 = vdwg.mxu0
    %v257 = vadd.f32 %v203, %v254
    %v258 = vld [vmem:[%s6] sm:$0x1]
    %v260 = vperm.slane %v258, 0
    %v262 = vadd.f32 %v257, %v260
    %vm263 = vcmp.gt.f32.partialorder %v262, 0.0
    %v264 = vmul.f32 %v262, 0.2
    %v265 = vsel %vm263, %v262, %v264
    %v266 = vpack.c.bf16 %v265, %v265
    %v267 = vld [vmem:[#allocation13] sm:$0xf]
    %v268 = vld [vmem:[#allocation13 + $0x4] sm:$0xf]
    %v269 = vld [vmem:[#allocation13 + $0x8] sm:$0xf]
    %v270 = vld [vmem:[#allocation13 + $0xc] sm:$0xf]
    %v271 = vld [vmem:[#allocation13 + $0x10] sm:$0xf]
    %v272 = vld [vmem:[#allocation13 + $0x14] sm:$0xf]
    %v273 = vld [vmem:[#allocation13 + $0x18] sm:$0xf]
    %v274 = vld [vmem:[#allocation13 + $0x1c] sm:$0xf]
    %v275 = vld [vmem:[#allocation13 + $0x20] sm:$0xf]
    %v276 = vld [vmem:[#allocation13 + $0x24] sm:$0xf]
    %v277 = vld [vmem:[#allocation13 + $0x28] sm:$0xf]
    %v278 = vld [vmem:[#allocation13 + $0x2c] sm:$0xf]
    %v279 = vld [vmem:[#allocation13 + $0x30] sm:$0xf]
    %v280 = vld [vmem:[#allocation13 + $0x34] sm:$0xf]
    %v281 = vld [vmem:[#allocation13 + $0x38] sm:$0xf]
    %v282 = vld [vmem:[#allocation13 + $0x3c] sm:$0xf]
    %v283 = vld [vmem:[%s8] sm:$0x1]
    %v285 = vperm.slane %v283, 0
    %v303 = vunpack.c.l.b16 %v267
    %v304 = vunpack.c.l.b16 %v268
    %v305 = vunpack.c.l.b16 %v269
    %v306 = vunpack.c.l.b16 %v270
    %v307 = vunpack.c.l.b16 %v271
    %v308 = vunpack.c.l.b16 %v272
    %v309 = vunpack.c.l.b16 %v273
    %v310 = vunpack.c.l.b16 %v274
    %v311 = vunpack.c.l.b16 %v275
    %v312 = vunpack.c.l.b16 %v276
    %v313 = vunpack.c.l.b16 %v277
    %v314 = vunpack.c.l.b16 %v278
    %v315 = vunpack.c.l.b16 %v279
    %v316 = vunpack.c.l.b16 %v280
    %v317 = vunpack.c.l.b16 %v281
    %v318 = vunpack.c.l.b16 %v282
    %v319 = vpack.c.b16 %v304, %v303
    %v320 = vpack.c.b16 %v306, %v305
    %v321 = vpack.c.b16 %v308, %v307
    %v322 = vpack.c.b16 %v310, %v309
    %v323 = vpack.c.b16 %v312, %v311
    %v324 = vpack.c.b16 %v314, %v313
    %v325 = vpack.c.b16 %v316, %v315
    %v326 = vpack.c.b16 %v318, %v317
    %335 = vmatpush.bf16.msra.mxu0 %v326
    %336 = vmatpush.bf16.msra.mxu0 %v325
    %337 = vmatpush.bf16.msra.mxu0 %v324
    %338 = vmatpush.bf16.msra.mxu0 %v323
    %339 = vmatpush.bf16.msra.mxu0 %v322
    %340 = vmatpush.bf16.msra.mxu0 %v321
    %341 = vmatpush.bf16.msra.mxu0 %v320
    %342 = vmatpush.bf16.msra.mxu0 %v319
    %343 = vmatmul.bf16.gmra.mxu0 %v266
    %v344 = vpop.f32.mrf.mxu0
    %v345 = vadd.f32 %v285, %v344
    %v346 = vpop.f32.mrf.mxu0
    %347 = vdwg.mxu0
    %v348 = vmax.f32 %v345, 0.0
    %349 = vst [vmem:[#allocation14] sm:$0xff] %v348
    // Predicated region
    $region66: #{tpu_custom_call.1} parent=1 // pred_check
      _
    $region67: #{tpu_custom_call.1} parent=1 // pred_check_branch
      %351 = sbr.rel (0) target = $region69
    $region68: #{tpu_custom_call.1} parent=1 // pred_region
      %353 = vsyncadd [#allocation4], 0
      %s355 = sshll.u32 [#allocation14], 4
      %s356 = int_to_ptr.vmem [resolvable:$true] %s355
      %s357 = sshll.u32 %s9, 4
      %s358 = int_to_ptr.hbm [resolvable:$true] %s357
      %360 = dma.vmem_to_hbm [thread:$0]  %s356, 128, %s358, [#allocation4]
    $region69: #{tpu_custom_call.1} parent=1 // pred_fallthru
      _
    // Predicated region
    $region70: #{tpu_custom_call.1} parent=1 // pred_check
      _
    $region71: #{tpu_custom_call.1} parent=1 // pred_check_branch
      %362 = sbr.rel (0) target = $region73
    $region72: #{tpu_custom_call.1} parent=1 // pred_region
      %364 = dma.done [#allocation4], 128
    $region73: #{tpu_custom_call.1} parent=1 // pred_fallthru
      _
    %365 = vsyncpa [#allocation3], 1
    %366 = vsyncpa [#allocation6], 1
    %367 = vsyncpa [#allocation9], 1
    %368 = vsyncpa [#allocation12], 1
    %369 = vsyncpa [#allocation4], 1

</llo_original>
